<compile_context>
chip_gen: v5e
topology: v5e:2x2
jax: 0.10.0
libtpu: 0.0.40
codegen_flags: <defaults>
</compile_context>

<pallas_src>
import jax
import jax.numpy as jnp
from jax import lax
from jax.experimental import pallas as pl
from jax.experimental.pallas import tpu as pltpu

EPS = 1e-3                          # matches CharbonnierLoss(eps=0.001)
_LANE_CHOICES = (1024, 512, 256, 128)
_TARGET_BLOCK_BYTES = 4 * 1024 * 1024   # ~4 MiB per input block


def _bilinear_half_downsample(y):
    """nn.Upsample(scale_factor=0.5, mode='bilinear', align_corners=False) on
    even spatial dims is exactly 2x2 average pooling."""
    n, c, h, w = y.shape
    assert h % 2 == 0 and w % 2 == 0, "downsample path expects even H, W"
    return y.reshape(n, c, h // 2, 2, w // 2, 2).mean(axis=(3, 5))


def _choose_layout(total):
    """Pick a lane-dense 2D layout (rows, lane) for the flattened tensor."""
    for lane in _LANE_CHOICES:                 # prefer >= 8 full-vreg rows
        if total % lane == 0 and total // lane >= 8:
            return lane, total // lane, 0
    for lane in _LANE_CHOICES:                 # small tensors: < 8 rows
        if total % lane == 0:
            return lane, total // lane, 0
    lane = 128                                 # rare fallback: flat tail pad
    rows = -(-total // lane)
    return lane, rows, rows * lane - total


def _make_kernel(*, block_r, lane, out_rows, nblocks, tail_remaining,
                 tail_is_partial, eps):
    # Python float => jaxpr literal (NOT a captured f32[] constant).
    eps2 = float(eps) * float(eps)
    groups = block_r // out_rows

    def _fold(v):
        # Fold groups of `out_rows` rows with pure full-vreg VALU adds; with
        # out_rows=32 @ lane=128 the accumulator is 4 independent vregs.
        if groups == 1:
            return v
        return v.reshape(groups, out_rows, lane).sum(axis=0)

    def kernel(x_ref, y_ref, out_ref):
        i = pl.program_id(0)                   # reduction ("arbitrary") axis

        @pl.when(i == 0)
        def _init():
            out_ref[...] = jnp.zeros_like(out_ref)

        # Inputs stay in native dtype in HBM; cast per block on the VPU.
        d = x_ref[...].astype(jnp.float32) - y_ref[...].astype(jnp.float32)
        v = jnp.sqrt(d * d + eps2)

        if not tail_is_partial:
            out_ref[...] += _fold(v)           # mask-free hot path
        else:
            @pl.when(i < nblocks - 1)
            def _interior():                   # interior blocks: no mask
                out_ref[...] += _fold(v)

            @pl.when(i == nblocks - 1)
            def _tail():                       # only the tail block pays the
                lin = (lax.broadcasted_iota(jnp.int32, (block_r, lane), 0)
                       * lane
                       + lax.broadcasted_iota(jnp.int32, (block_r, lane), 1))
                out_ref[...] += _fold(jnp.where(lin < tail_remaining, v, 0.0))

    return kernel


def charbonnier_loss(x, y, eps=EPS):
    """Pallas-backed CharbonnierLoss.forward(x, y)."""
    if x.shape[2] != y.shape[2]:               # same condition as x_kw == y_kw
        y = _bilinear_half_downsample(y)
    assert x.shape == y.shape

    total = x.size
    lane, rows, tail_pad = _choose_layout(total)

    xf = x.reshape(-1)
    yf = y.reshape(-1)
    if tail_pad:
        # Rare fallback (element count not a multiple of 128): small flat pad;
        # padded elements land in the tail block and are masked out in-kernel.
        xf = jnp.pad(xf, (0, tail_pad))
        yf = jnp.pad(yf, (0, tail_pad))
    x2 = xf.reshape(rows, lane)
    y2 = yf.reshape(rows, lane)

    # Row tile: multiple of 8 sublanes, ~4 MiB per input block (dtype-aware).
    itemsize = max(jnp.dtype(x.dtype).itemsize, jnp.dtype(y.dtype).itemsize)
    target_elems = _TARGET_BLOCK_BYTES // itemsize
    if rows >= 8:
        block_r_cap = max(8, 8 * (target_elems // (8 * lane)))
        block_r = min(block_r_cap, 8 * (rows // 8))
    else:
        block_r = rows                          # full-extent tiny block
    nblocks = -(-rows // block_r)

    block_elems = block_r * lane
    tail_remaining = total - (nblocks - 1) * block_elems   # real elems in tail
    tail_is_partial = tail_remaining < block_elems

    # Accumulator width: 32 rows (>=4 vregs) when possible to keep ILP in the
    # per-block fold; 8 rows otherwise; full block for tiny tensors.
    if block_r % 32 == 0:
        out_rows = 32
    elif block_r % 8 == 0:
        out_rows = 8
    else:
        out_rows = block_r

    # Explicit VMEM budget: 2 inputs x 2 pipeline buffers x block + output,
    # plus margin.  Stays <= 48 MiB (v7x physical is 64 MiB per TC).
    block_bytes = block_elems * itemsize
    out_bytes = out_rows * lane * 4
    vmem_limit = int(min(max(2 * 2 * block_bytes + 2 * out_bytes + (2 << 20),
                             16 << 20),
                         48 << 20))

    kernel = _make_kernel(block_r=block_r, lane=lane, out_rows=out_rows,
                          nblocks=nblocks, tail_remaining=tail_remaining,
                          tail_is_partial=tail_is_partial, eps=eps)

    partials = pl.pallas_call(
        kernel,
        out_shape=jax.ShapeDtypeStruct((out_rows, lane), jnp.float32),
        grid_spec=pltpu.PrefetchScalarGridSpec(
            num_scalar_prefetch=0,
            grid=(nblocks,),
            in_specs=[
                pl.BlockSpec((block_r, lane), lambda i: (i, 0)),
                pl.BlockSpec((block_r, lane), lambda i: (i, 0)),
            ],
            out_specs=pl.BlockSpec((out_rows, lane), lambda i: (0, 0)),
        ),
        compiler_params=pltpu.CompilerParams(
            dimension_semantics=("arbitrary",),
            vmem_limit_bytes=vmem_limit),
    )(x2, y2)

    # Single tiny cross-lane reduction outside the kernel.
    return jnp.sum(partials) / total


def _reference_loss(x, y, eps=EPS):
    if x.shape[2] != y.shape[2]:
        y = _bilinear_half_downsample(y)
    d = x.astype(jnp.float32) - y.astype(jnp.float32)
    return jnp.mean(jnp.sqrt(d * d + eps * eps))


if __name__ == "__main__":
    key = jax.random.PRNGKey(0)
    k1, k2, k3, k4, k5 = jax.random.split(key, 5)

    # same-resolution path (N=2, C=4, H=W=16)
    x = jax.random.normal(k1, (2, 4, 16, 16), jnp.float32)
    y = jax.random.normal(k2, (2, 4, 16, 16), jnp.float32)
    loss_same = charbonnier_loss(x, y)

    # downsample path (target at 2x spatial resolution)
    y_big = jax.random.normal(k3, (2, 4, 32, 32), jnp.float32)
    loss_down = charbonnier_loss(x, y_big)

    # ragged / multi-block path (exercises the gated tail mask)
    xr = jax.random.normal(k4, (2, 3, 40, 72), jnp.float32)
    yr = jax.random.normal(k5, (2, 3, 40, 72), jnp.float32)
    loss_ragged = charbonnier_loss(xr, yr)

    jax.block_until_ready((loss_same, loss_down, loss_ragged))

    assert jnp.allclose(loss_same, _reference_loss(x, y), atol=1e-5)
    assert jnp.allclose(loss_down, _reference_loss(x, y_big), atol=1e-5)
    assert jnp.allclose(loss_ragged, _reference_loss(xr, yr), atol=1e-5)

    print("KERNEL_OK")
</pallas_src>

<mosaic_0001>
module attributes {stable_mosaic.version = 11 : i64} {
  func.func @kernel(%arg0: i32, %arg1: memref<8x256xf32, #tpu.memory_space<vmem>>, %arg2: memref<8x256xf32, #tpu.memory_space<vmem>>, %arg3: memref<8x256xf32, #tpu.memory_space<vmem>>) attributes {dimension_semantics = [#tpu.dimension_semantics<arbitrary>], iteration_bounds = array<i64: 1>, scalar_prefetch = 0 : i64, scratch_operands = 0 : i64, tpu.core_type = #tpu.core_type<tc>, window_params = [{transform_indices = @transform_0, window_bounds = array<i64: 8, 256>}, {transform_indices = @transform_1, window_bounds = array<i64: 8, 256>}, {pipeline_mode = #tpu.pipeline_mode<synchronous>, transform_indices = @transform_2, window_bounds = array<i64: 8, 256>}]} {
    %c0_i32 = arith.constant 0 : i32
    %0 = arith.cmpi eq, %arg0, %c0_i32 : i32
    %1 = arith.extui %0 : i1 to i32
    %c0_i32_0 = arith.constant 0 : i32
    %2 = arith.cmpi ne, %1, %c0_i32_0 : i32
    scf.if %2 {
      %cst_8 = arith.constant 0.000000e+00 : f32
      %13 = vector.broadcast %cst_8 : f32 to vector<8x256xf32>
      %c0_9 = arith.constant 0 : index
      %c0_10 = arith.constant 0 : index
      %14 = vector.load %arg3[%c0_9, %c0_10] : memref<8x256xf32, #tpu.memory_space<vmem>>, vector<8x256xf32>
      tpu.vector_store %arg3[%c0_9, %c0_10], %13 {strides = array<i32>} : memref<8x256xf32, #tpu.memory_space<vmem>>, vector<8x256xf32>,
    } else {
    }
    %c0 = arith.constant 0 : index
    %c0_1 = arith.constant 0 : index
    %3 = vector.load %arg1[%c0, %c0_1] : memref<8x256xf32, #tpu.memory_space<vmem>>, vector<8x256xf32>
    %c0_2 = arith.constant 0 : index
    %c0_3 = arith.constant 0 : index
    %4 = vector.load %arg2[%c0_2, %c0_3] : memref<8x256xf32, #tpu.memory_space<vmem>>, vector<8x256xf32>
    %5 = arith.subf %3, %4 : vector<8x256xf32>
    %6 = arith.mulf %5, %5 : vector<8x256xf32>
    %cst = arith.constant 9.99999997E-7 : f32
    %7 = vector.broadcast %cst : f32 to vector<8x256xf32>
    %8 = arith.addf %6, %7 : vector<8x256xf32>
    %9 = math.sqrt %8 : vector<8x256xf32>
    %c0_4 = arith.constant 0 : index
    %c0_5 = arith.constant 0 : index
    %10 = vector.load %arg3[%c0_4, %c0_5] : memref<8x256xf32, #tpu.memory_space<vmem>>, vector<8x256xf32>
    %11 = arith.addf %10, %9 : vector<8x256xf32>
    %c0_6 = arith.constant 0 : index
    %c0_7 = arith.constant 0 : index
    %12 = vector.load %arg3[%c0_6, %c0_7] : memref<8x256xf32, #tpu.memory_space<vmem>>, vector<8x256xf32>
    tpu.vector_store %arg3[%c0_6, %c0_7], %11 {strides = array<i32>} : memref<8x256xf32, #tpu.memory_space<vmem>>, vector<8x256xf32>,
    return
  }
  func.func @transform_0(%arg0: i32) -> (i32, i32) {
    %c0_i32 = arith.constant 0 : i32
    %c0_i32_0 = arith.constant 0 : i32
    return %arg0, %c0_i32 : i32, i32
  }
  func.func @transform_1(%arg0: i32) -> (i32, i32) {
    %c0_i32 = arith.constant 0 : i32
    %c0_i32_0 = arith.constant 0 : i32
    return %arg0, %c0_i32 : i32, i32
  }
  func.func @transform_2(%arg0: i32) -> (i32, i32) {
    %c0_i32 = arith.constant 0 : i32
    %c0_i32_0 = arith.constant 0 : i32
    %c0_i32_1 = arith.constant 0 : i32
    return %c0_i32, %c0_i32_0 : i32, i32
  }
}

</mosaic_0001>

<llo_original>
// kernel: tpu_custom_call.1
$region0: #{tpu_custom_call.1}
  #allocation0 [shape = 'u32[]', space=smem, size = 0x4, offset = 0x4, fixed_abs, tag = 'smem constant byte address 0x4 - core index']
  #allocation1 [shape = 'u32[72,128]{1,0:T(1,128)}', space=vmem, size = 0x9000, scoped, tag = 'internal scratch']
  %s0 = inlined_call_operand.hbm [shape: f32[8,256], index: 0, kind: input, shape index: {}]
  %s1 = inlined_call_operand.hbm [shape: f32[8,256], index: 1, kind: input, shape index: {}]
  %s2 = inlined_call_operand.hbm [shape: f32[8,256], index: 2, kind: output, shape index: {}]
  %s3 = sld [smem:[#allocation0]]
  $region30: #{tpu_custom_call.1} parent=0
    _
  %s5 = ssub.s32 1, %s3
  %s6 = scalar_select 0, %s5, %s3
  $region1: #{tpu_custom_call.1} parent=0
    #allocation2 [shape = 'u8[8192]{0}', space=vmem, size = 0x2000, scoped, tag = 'input window, operand 0, single buffered']
    #allocation3 [shape = 's32[1]{0}', space=sflag, size = 0x4, scoped, tag = 'scoped memory for tpu_custom_call.1']
    #allocation4 [shape = 's32[1]{0}', space=sflag, size = 0x4, scoped, tag = 'scoped memory for tpu_custom_call.1']
    #allocation5 [shape = 'u8[8192]{0}', space=vmem, size = 0x2000, scoped, tag = 'input window, operand 1, single buffered']
    #allocation6 [shape = 's32[1]{0}', space=sflag, size = 0x4, scoped, tag = 'scoped memory for tpu_custom_call.1']
    #allocation7 [shape = 'u8[8192]{0}', space=vmem, size = 0x2000, scoped, tag = 'output window, operand 0, single buffered']
    %7 = vsyncpa [#allocation3], 0
    %8 = vsyncpa [#allocation6], 0
    %9 = vsyncpa [#allocation4], 0
    // Predicated region
    $region2: #{tpu_custom_call.1} parent=1 // pred_check
      _
    $region3: #{tpu_custom_call.1} parent=1 // pred_check_branch
      %11 = sbr.rel (0) target = $region5
    $region4: #{tpu_custom_call.1} parent=1 // pred_region
      %13 = vsyncadd [#allocation3], 0
      %s15 = sshll.u32 %s0, 4
      %s16 = int_to_ptr.hbm [resolvable:$true] %s15
      %s17 = sshll.u32 [#allocation2], 4
      %s18 = int_to_ptr.vmem [resolvable:$true] %s17
      %20 = dma.hbm_to_vmem [thread:$0]  %s16, 256, %s18, [#allocation3]
    $region5: #{tpu_custom_call.1} parent=1 // pred_fallthru
      _
    // Predicated region
    $region6: #{tpu_custom_call.1} parent=1 // pred_check
      _
    $region7: #{tpu_custom_call.1} parent=1 // pred_check_branch
      %22 = sbr.rel (0) target = $region9
    $region8: #{tpu_custom_call.1} parent=1 // pred_region
      %24 = vsyncadd [#allocation6], 0
      %s26 = sshll.u32 %s1, 4
      %s27 = int_to_ptr.hbm [resolvable:$true] %s26
      %s28 = sshll.u32 [#allocation5], 4
      %s29 = int_to_ptr.vmem [resolvable:$true] %s28
      %31 = dma.hbm_to_vmem [thread:$0]  %s27, 256, %s29, [#allocation6]
    $region9: #{tpu_custom_call.1} parent=1 // pred_fallthru
      _
    // Predicated region
    $region10: #{tpu_custom_call.1} parent=1 // pred_check
      _
    $region11: #{tpu_custom_call.1} parent=1 // pred_check_branch
      %33 = sbr.rel (0) target = $region13
    $region12: #{tpu_custom_call.1} parent=1 // pred_region
      %35 = dma.done [#allocation3], 256
    $region13: #{tpu_custom_call.1} parent=1 // pred_fallthru
      _
    // Predicated region
    $region14: #{tpu_custom_call.1} parent=1 // pred_check
      _
    $region15: #{tpu_custom_call.1} parent=1 // pred_check_branch
      %37 = sbr.rel (0) target = $region17
    $region16: #{tpu_custom_call.1} parent=1 // pred_region
      %39 = dma.done [#allocation6], 256
    $region17: #{tpu_custom_call.1} parent=1 // pred_fallthru
      _
    %p40 = scmp.eq.s32.totalorder 0, 0
    // Predicated region
    $region18: #{tpu_custom_call.1} parent=1 // pred_check
      %p41 = pneg %p40
    $region19: #{tpu_custom_call.1} parent=1 // pred_check_branch
      %43 = sbr.rel (%p41) target = $region21
    $region20: #{tpu_custom_call.1} parent=1 // pred_region
      %44 = vst [vmem:[#allocation7] sm:$0xff] 0.0
      %45 = vst [vmem:[#allocation7 + $0x8] sm:$0xff] 0.0
    $region21: #{tpu_custom_call.1} parent=1 // pred_fallthru
      _
    %v46 = vld [vmem:[#allocation2] sm:$0xff]
    %v47 = vld [vmem:[#allocation2 + $0x8] sm:$0xff]
    %v48 = vld [vmem:[#allocation5] sm:$0xff]
    %v49 = vld [vmem:[#allocation5 + $0x8] sm:$0xff]
    %v50 = vsub.f32 %v46, %v48
    %v51 = vsub.f32 %v47, %v49
    %v52 = vmul.f32 %v50, %v50
    %v53 = vmul.f32 %v51, %v51
    %v54 = vadd.f32 %v52, 1e-06
    %v55 = vadd.f32 %v53, 1e-06
    %v56 = vrsqrt.pop %v54
    %v57 = vmul.f32 %v56, %v54
    %v58 = vmul.f32 %v57, %v56
    %v59 = vmul.f32 0.5, %v58
    %v60 = vsub.f32 1.5, %v59
    %v61 = vmul.f32 %v56, %v60
    %v62 = vmul.f32 %v54, %v61
    %vm63 = vcmp.eq.f32.partialorder %v54, inf
    %v64 = vsel %vm63, %v54, %v62
    %vm65 = vcmp.eq.f32.partialorder %v54, 0.0
    %v66 = vand.u32 %v54, 2147483648
    %v67 = vsel %vm65, %v66, %v64
    %v68 = vrsqrt.pop %v55
    %v69 = vmul.f32 %v68, %v55
    %v70 = vmul.f32 %v69, %v68
    %v71 = vmul.f32 0.5, %v70
    %v72 = vsub.f32 1.5, %v71
    %v73 = vmul.f32 %v68, %v72
    %v74 = vmul.f32 %v55, %v73
    %vm75 = vcmp.eq.f32.partialorder %v55, inf
    %v76 = vsel %vm75, %v55, %v74
    %vm77 = vcmp.eq.f32.partialorder %v55, 0.0
    %v78 = vand.u32 %v55, 2147483648
    %v79 = vsel %vm77, %v78, %v76
    %v80 = vld [vmem:[#allocation7] sm:$0xff]
    %v81 = vld [vmem:[#allocation7 + $0x8] sm:$0xff]
    %v82 = vadd.f32 %v80, %v67
    %v83 = vadd.f32 %v81, %v79
    %84 = vst [vmem:[#allocation7] sm:$0xff] %v82
    %85 = vst [vmem:[#allocation7 + $0x8] sm:$0xff] %v83
    // Predicated region
    $region22: #{tpu_custom_call.1} parent=1 // pred_check
      _
    $region23: #{tpu_custom_call.1} parent=1 // pred_check_branch
      %87 = sbr.rel (0) target = $region25
    $region24: #{tpu_custom_call.1} parent=1 // pred_region
      %89 = vsyncadd [#allocation4], 0
      %s91 = sshll.u32 [#allocation7], 4
      %s92 = int_to_ptr.vmem [resolvable:$true] %s91
      %s93 = sshll.u32 %s2, 4
      %s94 = int_to_ptr.hbm [resolvable:$true] %s93
      %96 = dma.vmem_to_hbm [thread:$0]  %s92, 256, %s94, [#allocation4]
    $region25: #{tpu_custom_call.1} parent=1 // pred_fallthru
      _
    // Predicated region
    $region26: #{tpu_custom_call.1} parent=1 // pred_check
      _
    $region27: #{tpu_custom_call.1} parent=1 // pred_check_branch
      %98 = sbr.rel (0) target = $region29
    $region28: #{tpu_custom_call.1} parent=1 // pred_region
      %100 = dma.done [#allocation4], 256
    $region29: #{tpu_custom_call.1} parent=1 // pred_fallthru
      _
    %101 = vsyncpa [#allocation3], 1
    %102 = vsyncpa [#allocation6], 1
    %103 = vsyncpa [#allocation4], 1

</llo_original>
